<compile_context>
chip_gen: v5e
topology: v5e:2x2
jax: 0.10.0
libtpu: 0.0.40
codegen_flags: <defaults>
</compile_context>

<pallas_src>
import jax
import jax.numpy as jnp
from jax.experimental import pallas as pl
from jax.experimental.pallas import tpu as pltpu


EPS = 1e-5
LANE = 128  # lane width: pad feature dims to multiples of this


def decoder_kernel(x_ref,
                   w1_ref, g1_ref, be1_ref,
                   w2_ref, g2_ref, be2_ref,
                   w3_ref, b3_ref,
                   out_ref):
    x = x_ref[...]

    # ---- Linear 1 (bias cancelled by BN) + fused BatchNorm1d + ReLU ---------
    h = jnp.dot(x, w1_ref[...], preferred_element_type=jnp.float32)
    mean = jnp.mean(h, axis=0, keepdims=True)
    var = jnp.mean((h - mean) * (h - mean), axis=0, keepdims=True)  # biased var
    scale = g1_ref[...] * jax.lax.rsqrt(var + EPS)
    shift = be1_ref[...] - mean * scale
    h = jnp.maximum(h * scale + shift, 0.0)

    # ---- Linear 2 (bias cancelled by BN) + fused BatchNorm1d + ReLU ---------
    h = jnp.dot(h, w2_ref[...], preferred_element_type=jnp.float32)
    mean = jnp.mean(h, axis=0, keepdims=True)
    var = jnp.mean((h - mean) * (h - mean), axis=0, keepdims=True)
    scale = g2_ref[...] * jax.lax.rsqrt(var + EPS)
    shift = be2_ref[...] - mean * scale
    h = jnp.maximum(h * scale + shift, 0.0)

    # ---- Linear 3 + Sigmoid --------------------------------------------------
    h = jnp.dot(h, w3_ref[...], preferred_element_type=jnp.float32) + b3_ref[...]
    # exp() lands on the EUP; pl.reciprocal(approx=True) would push the divide
    # there too, at ~6e-5 relative error — kept exact to match the reference.
    out_ref[...] = pl.reciprocal(1.0 + jnp.exp(-h), approx=False)


def _round_up(n, m):
    return pl.cdiv(n, m) * m


def decoder_forward(x, params):
    """x: [B, latent_size] (or [B, ...], flattened).  Returns [B, output_size]."""
    B = x.shape[0]
    x = x.reshape(B, -1)                      # x.view(x.size(0), -1)
    (w1, b1, g1, be1, w2, b2, g2, be2, w3, b3) = params
    del b1, b2  # exactly cancelled by training-mode BatchNorm

    latent, lin1 = w1.shape
    lin2 = w2.shape[1]
    out_size = w3.shape[1]

    # Lane-dense padding of every feature dim to a multiple of 128.
    latent_p = _round_up(latent, LANE)
    lin1_p = _round_up(lin1, LANE)
    lin2_p = _round_up(lin2, LANE)
    out_p = _round_up(out_size, LANE)

    x_p = jnp.pad(x, ((0, 0), (0, latent_p - latent)))
    w1_p = jnp.pad(w1, ((0, latent_p - latent), (0, lin1_p - lin1)))
    g1_p = jnp.pad(g1, ((0, 0), (0, lin1_p - lin1)), constant_values=1.0)
    be1_p = jnp.pad(be1, ((0, 0), (0, lin1_p - lin1)))
    w2_p = jnp.pad(w2, ((0, lin1_p - lin1), (0, lin2_p - lin2)))
    g2_p = jnp.pad(g2, ((0, 0), (0, lin2_p - lin2)), constant_values=1.0)
    be2_p = jnp.pad(be2, ((0, 0), (0, lin2_p - lin2)))
    w3_p = jnp.pad(w3, ((0, lin2_p - lin2), (0, out_p - out_size)))
    b3_p = jnp.pad(b3, ((0, 0), (0, out_p - out_size)))

    # Padded feature columns stay exactly zero through BN+ReLU (mean=0, var=0,
    # h=0 -> 0) and the padded output columns are sliced off below.

    vmem = pl.BlockSpec(memory_space=pltpu.MemorySpace.VMEM)
    args = (x_p, w1_p, g1_p, be1_p, w2_p, g2_p, be2_p, w3_p, b3_p)

    out_padded = pl.pallas_call(
        decoder_kernel,
        out_shape=jax.ShapeDtypeStruct((B, out_p), jnp.float32),
        in_specs=[vmem] * len(args),
        out_specs=vmem,
    )(*args)
    return out_padded[:, :out_size]


def init_params(key, latent_size, lin1_size, lin2_size, output_size):
    """Deterministic synthetic parameters (PyTorch-like init scales).

    Linear weights stored as [in, out]; BN gamma=1, beta=0 (PyTorch init)."""
    ks = jax.random.split(key, 6)

    def lin(kw, kb, fin, fout):
        bound = 1.0 / jnp.sqrt(fin)
        w = jax.random.uniform(kw, (fin, fout), jnp.float32, -bound, bound)
        b = jax.random.uniform(kb, (1, fout), jnp.float32, -bound, bound)
        return w, b

    w1, b1 = lin(ks[0], ks[1], latent_size, lin1_size)
    w2, b2 = lin(ks[2], ks[3], lin1_size, lin2_size)
    w3, b3 = lin(ks[4], ks[5], lin2_size, output_size)
    g1, be1 = jnp.ones((1, lin1_size), jnp.float32), jnp.zeros((1, lin1_size), jnp.float32)
    g2, be2 = jnp.ones((1, lin2_size), jnp.float32), jnp.zeros((1, lin2_size), jnp.float32)
    return (w1, b1, g1, be1, w2, b2, g2, be2, w3, b3)


def reference_forward(x, params):
    """Pure-JAX reference matching the PyTorch training-mode forward
    (including the Linear biases, which cancel under BatchNorm)."""
    (w1, b1, g1, be1, w2, b2, g2, be2, w3, b3) = params
    x = x.reshape(x.shape[0], -1)

    def bn(h, g, be):
        m = jnp.mean(h, axis=0, keepdims=True)
        v = jnp.mean((h - m) ** 2, axis=0, keepdims=True)
        return (h - m) / jnp.sqrt(v + EPS) * g + be

    h = jnp.maximum(bn(x @ w1 + b1, g1, be1), 0.0)
    h = jnp.maximum(bn(h @ w2 + b2, g2, be2), 0.0)
    return jax.nn.sigmoid(h @ w3 + b3)


if __name__ == "__main__":
    latent_size, lin1_size, lin2_size, output_size = 16, 32, 32, 64
    batch = 8

    key = jax.random.PRNGKey(0)
    k_x, k_p = jax.random.split(key)
    x = jax.random.normal(k_x, (batch, latent_size), jnp.float32)
    params = init_params(k_p, latent_size, lin1_size, lin2_size, output_size)

    out = decoder_forward(x, params)
    out = jax.block_until_ready(out)

    ref = reference_forward(x, params)
    assert out.shape == (batch, output_size)
    assert jnp.allclose(out, ref, atol=2e-5, rtol=2e-5), "mismatch vs reference"

    # TODO(synk): for non-toy sizes (B >= ~1k, hidden >= 256) add a batch/
    # feature grid (two-pass BN over batch tiles) and bf16 matmul inputs; at
    # these shapes the kernel is launch-overhead bound so it stays gridless.
    print("KERNEL_OK")
</pallas_src>

<mosaic_0001>
module attributes {stable_mosaic.version = 11 : i64} {
  func.func @decoder_kernel(%arg0: memref<8x128xf32, #tpu.memory_space<vmem>>, %arg1: memref<128x128xf32, #tpu.memory_space<vmem>>, %arg2: memref<1x128xf32, #tpu.memory_space<vmem>>, %arg3: memref<1x128xf32, #tpu.memory_space<vmem>>, %arg4: memref<128x128xf32, #tpu.memory_space<vmem>>, %arg5: memref<1x128xf32, #tpu.memory_space<vmem>>, %arg6: memref<1x128xf32, #tpu.memory_space<vmem>>, %arg7: memref<128x128xf32, #tpu.memory_space<vmem>>, %arg8: memref<1x128xf32, #tpu.memory_space<vmem>>, %arg9: memref<8x128xf32, #tpu.memory_space<vmem>>) attributes {dimension_semantics = [], scalar_prefetch = 0 : i64, scratch_operands = 0 : i64, tpu.core_type = #tpu.core_type<tc>} {
    %c0 = arith.constant 0 : index
    %c0_0 = arith.constant 0 : index
    %0 = vector.load %arg0[%c0, %c0_0] : memref<8x128xf32, #tpu.memory_space<vmem>>, vector<8x128xf32>
    %c0_1 = arith.constant 0 : index
    %c0_2 = arith.constant 0 : index
    %1 = vector.load %arg1[%c0_1, %c0_2] : memref<128x128xf32, #tpu.memory_space<vmem>>, vector<128x128xf32>
    %cst = arith.constant dense<0.000000e+00> : vector<8x128xf32>
    %2 = tpu.matmul %0, %1, %cst {dimension_numbers = #tpu.dot_dimension_numbers<[1], [0], [0], [1], [0, 0, 1, 1], [], []>} : vector<8x128xf32>, vector<128x128xf32>, vector<8x128xf32> -> vector<8x128xf32>
    %cst_3 = arith.constant dense<0.000000e+00> : vector<128xf32>
    %3 = vector.multi_reduction <add>, %2, %cst_3 [0] : vector<8x128xf32> to vector<128xf32>
    %4 = vector.shape_cast %3 : vector<128xf32> to vector<1x128xf32>
    %cst_4 = arith.constant 8.000000e+00 : f32
    %5 = vector.broadcast %cst_4 : f32 to vector<1x128xf32>
    %6 = arith.divf %4, %5 : vector<1x128xf32>
    %7 = vector.broadcast %6 : vector<1x128xf32> to vector<8x128xf32>
    %8 = arith.subf %2, %7 : vector<8x128xf32>
    %9 = vector.broadcast %6 : vector<1x128xf32> to vector<8x128xf32>
    %10 = arith.subf %2, %9 : vector<8x128xf32>
    %11 = arith.mulf %8, %10 : vector<8x128xf32>
    %cst_5 = arith.constant dense<0.000000e+00> : vector<128xf32>
    %12 = vector.multi_reduction <add>, %11, %cst_5 [0] : vector<8x128xf32> to vector<128xf32>
    %13 = vector.shape_cast %12 : vector<128xf32> to vector<1x128xf32>
    %cst_6 = arith.constant 8.000000e+00 : f32
    %14 = vector.broadcast %cst_6 : f32 to vector<1x128xf32>
    %15 = arith.divf %13, %14 : vector<1x128xf32>
    %c0_7 = arith.constant 0 : index
    %c0_8 = arith.constant 0 : index
    %16 = vector.load %arg2[%c0_7, %c0_8] : memref<1x128xf32, #tpu.memory_space<vmem>>, vector<1x128xf32>
    %cst_9 = arith.constant 9.99999974E-6 : f32
    %17 = vector.broadcast %cst_9 : f32 to vector<1x128xf32>
    %18 = arith.addf %15, %17 : vector<1x128xf32>
    %19 = math.rsqrt %18 : vector<1x128xf32>
    %20 = arith.mulf %16, %19 : vector<1x128xf32>
    %c0_10 = arith.constant 0 : index
    %c0_11 = arith.constant 0 : index
    %21 = vector.load %arg3[%c0_10, %c0_11] : memref<1x128xf32, #tpu.memory_space<vmem>>, vector<1x128xf32>
    %22 = arith.mulf %6, %20 : vector<1x128xf32>
    %23 = arith.subf %21, %22 : vector<1x128xf32>
    %24 = vector.broadcast %20 : vector<1x128xf32> to vector<8x128xf32>
    %25 = arith.mulf %2, %24 : vector<8x128xf32>
    %26 = vector.broadcast %23 : vector<1x128xf32> to vector<8x128xf32>
    %27 = arith.addf %25, %26 : vector<8x128xf32>
    %cst_12 = arith.constant 0.000000e+00 : f32
    %28 = vector.broadcast %cst_12 : f32 to vector<8x128xf32>
    %29 = arith.maximumf %27, %28 : vector<8x128xf32>
    %c0_13 = arith.constant 0 : index
    %c0_14 = arith.constant 0 : index
    %30 = vector.load %arg4[%c0_13, %c0_14] : memref<128x128xf32, #tpu.memory_space<vmem>>, vector<128x128xf32>
    %cst_15 = arith.constant dense<0.000000e+00> : vector<8x128xf32>
    %31 = tpu.matmul %29, %30, %cst_15 {dimension_numbers = #tpu.dot_dimension_numbers<[1], [0], [0], [1], [0, 0, 1, 1], [], []>} : vector<8x128xf32>, vector<128x128xf32>, vector<8x128xf32> -> vector<8x128xf32>
    %cst_16 = arith.constant dense<0.000000e+00> : vector<128xf32>
    %32 = vector.multi_reduction <add>, %31, %cst_16 [0] : vector<8x128xf32> to vector<128xf32>
    %33 = vector.shape_cast %32 : vector<128xf32> to vector<1x128xf32>
    %cst_17 = arith.constant 8.000000e+00 : f32
    %34 = vector.broadcast %cst_17 : f32 to vector<1x128xf32>
    %35 = arith.divf %33, %34 : vector<1x128xf32>
    %36 = vector.broadcast %35 : vector<1x128xf32> to vector<8x128xf32>
    %37 = arith.subf %31, %36 : vector<8x128xf32>
    %38 = vector.broadcast %35 : vector<1x128xf32> to vector<8x128xf32>
    %39 = arith.subf %31, %38 : vector<8x128xf32>
    %40 = arith.mulf %37, %39 : vector<8x128xf32>
    %cst_18 = arith.constant dense<0.000000e+00> : vector<128xf32>
    %41 = vector.multi_reduction <add>, %40, %cst_18 [0] : vector<8x128xf32> to vector<128xf32>
    %42 = vector.shape_cast %41 : vector<128xf32> to vector<1x128xf32>
    %cst_19 = arith.constant 8.000000e+00 : f32
    %43 = vector.broadcast %cst_19 : f32 to vector<1x128xf32>
    %44 = arith.divf %42, %43 : vector<1x128xf32>
    %c0_20 = arith.constant 0 : index
    %c0_21 = arith.constant 0 : index
    %45 = vector.load %arg5[%c0_20, %c0_21] : memref<1x128xf32, #tpu.memory_space<vmem>>, vector<1x128xf32>
    %cst_22 = arith.constant 9.99999974E-6 : f32
    %46 = vector.broadcast %cst_22 : f32 to vector<1x128xf32>
    %47 = arith.addf %44, %46 : vector<1x128xf32>
    %48 = math.rsqrt %47 : vector<1x128xf32>
    %49 = arith.mulf %45, %48 : vector<1x128xf32>
    %c0_23 = arith.constant 0 : index
    %c0_24 = arith.constant 0 : index
    %50 = vector.load %arg6[%c0_23, %c0_24] : memref<1x128xf32, #tpu.memory_space<vmem>>, vector<1x128xf32>
    %51 = arith.mulf %35, %49 : vector<1x128xf32>
    %52 = arith.subf %50, %51 : vector<1x128xf32>
    %53 = vector.broadcast %49 : vector<1x128xf32> to vector<8x128xf32>
    %54 = arith.mulf %31, %53 : vector<8x128xf32>
    %55 = vector.broadcast %52 : vector<1x128xf32> to vector<8x128xf32>
    %56 = arith.addf %54, %55 : vector<8x128xf32>
    %cst_25 = arith.constant 0.000000e+00 : f32
    %57 = vector.broadcast %cst_25 : f32 to vector<8x128xf32>
    %58 = arith.maximumf %56, %57 : vector<8x128xf32>
    %c0_26 = arith.constant 0 : index
    %c0_27 = arith.constant 0 : index
    %59 = vector.load %arg7[%c0_26, %c0_27] : memref<128x128xf32, #tpu.memory_space<vmem>>, vector<128x128xf32>
    %cst_28 = arith.constant dense<0.000000e+00> : vector<8x128xf32>
    %60 = tpu.matmul %58, %59, %cst_28 {dimension_numbers = #tpu.dot_dimension_numbers<[1], [0], [0], [1], [0, 0, 1, 1], [], []>} : vector<8x128xf32>, vector<128x128xf32>, vector<8x128xf32> -> vector<8x128xf32>
    %c0_29 = arith.constant 0 : index
    %c0_30 = arith.constant 0 : index
    %61 = vector.load %arg8[%c0_29, %c0_30] : memref<1x128xf32, #tpu.memory_space<vmem>>, vector<1x128xf32>
    %62 = vector.broadcast %61 : vector<1x128xf32> to vector<8x128xf32>
    %63 = arith.addf %60, %62 : vector<8x128xf32>
    %cst_31 = arith.constant 0.000000e+00 : f32
    %64 = vector.broadcast %cst_31 : f32 to vector<8x128xf32>
    %65 = arith.subf %64, %63 : vector<8x128xf32>
    %66 = math.exp %65 : vector<8x128xf32>
    %cst_32 = arith.constant 1.000000e+00 : f32
    %67 = vector.broadcast %cst_32 : f32 to vector<8x128xf32>
    %68 = arith.addf %67, %66 : vector<8x128xf32>
    %69 = tpu.reciprocal %68 : vector<8x128xf32> -> vector<8x128xf32>
    %c0_33 = arith.constant 0 : index
    %c0_34 = arith.constant 0 : index
    %70 = vector.load %arg9[%c0_33, %c0_34] : memref<8x128xf32, #tpu.memory_space<vmem>>, vector<8x128xf32>
    tpu.vector_store %arg9[%c0_33, %c0_34], %69 {strides = array<i32>} : memref<8x128xf32, #tpu.memory_space<vmem>>, vector<8x128xf32>,
    return
  }
}

</mosaic_0001>

<llo_original>
// kernel: tpu_custom_call.1
$region0: #{tpu_custom_call.1}
  #allocation0 [shape = 'u32[]', space=smem, size = 0x4, offset = 0x4, fixed_abs, tag = 'smem constant byte address 0x4 - core index']
  #allocation1 [shape = 'u32[72,128]{1,0:T(1,128)}', space=vmem, size = 0x9000, scoped, tag = 'internal scratch']
  %s0 = inlined_call_operand.hbm [shape: f32[8,128], index: 0, kind: input, shape index: {}]
  %s1 = inlined_call_operand.hbm [shape: f32[128,128], index: 1, kind: input, shape index: {}]
  %s2 = inlined_call_operand.vmem [shape: f32[1,128], index: 2, kind: input, shape index: {}]
  %s3 = inlined_call_operand.vmem [shape: f32[1,128], index: 3, kind: input, shape index: {}]
  %s4 = inlined_call_operand.hbm [shape: f32[128,128], index: 4, kind: input, shape index: {}]
  %s5 = inlined_call_operand.vmem [shape: f32[1,128], index: 5, kind: input, shape index: {}]
  %s6 = inlined_call_operand.vmem [shape: f32[1,128], index: 6, kind: input, shape index: {}]
  %s7 = inlined_call_operand.hbm [shape: f32[128,128], index: 7, kind: input, shape index: {}]
  %s8 = inlined_call_operand.vmem [shape: f32[1,128], index: 8, kind: input, shape index: {}]
  %s9 = inlined_call_operand.hbm [shape: f32[8,128], index: 9, kind: output, shape index: {}]
  %s10 = sld [smem:[#allocation0]]
  $region62: #{tpu_custom_call.1} parent=0
    _
  %s12 = ssub.s32 1, %s10
  %s13 = scalar_select 0, %s12, %s10
  $region1: #{tpu_custom_call.1} parent=0
    #allocation2 [shape = 'u8[4096]{0}', space=vmem, size = 0x1000, scoped, tag = 'input window, operand 0, single buffered']
    #allocation3 [shape = 's32[1]{0}', space=sflag, size = 0x4, scoped, tag = 'scoped memory for tpu_custom_call.1']
    #allocation4 [shape = 's32[1]{0}', space=sflag, size = 0x4, scoped, tag = 'scoped memory for tpu_custom_call.1']
    #allocation5 [shape = 'u8[65536]{0}', space=vmem, size = 0x10000, scoped, tag = 'input window, operand 1, single buffered']
    #allocation6 [shape = 's32[1]{0}', space=sflag, size = 0x4, scoped, tag = 'scoped memory for tpu_custom_call.1']
    #allocation7 [shape = 'u8[65536]{0}', space=vmem, size = 0x10000, scoped, tag = 'input window, operand 4, single buffered']
    #allocation8 [shape = 'u8[65536]{0}', space=vmem, size = 0x10000, scoped, tag = 'input window, operand 7, single buffered']
    #allocation9 [shape = 's32[1]{0}', space=sflag, size = 0x4, scoped, tag = 'scoped memory for tpu_custom_call.1']
    #allocation10 [shape = 'u8[4096]{0}', space=vmem, size = 0x1000, scoped, tag = 'output window, operand 0, single buffered']
    %14 = vsyncpa [#allocation3], 0
    %15 = vsyncpa [#allocation6], 0
    %16 = vsyncpa [#allocation9], 0
    %17 = vsyncpa [#allocation4], 0
    // Predicated region
    $region2: #{tpu_custom_call.1} parent=1 // pred_check
      _
    $region3: #{tpu_custom_call.1} parent=1 // pred_check_branch
      %19 = sbr.rel (0) target = $region5
    $region4: #{tpu_custom_call.1} parent=1 // pred_region
      %21 = vsyncadd [#allocation3], 0
      %s23 = sshll.u32 %s0, 4
      %s24 = int_to_ptr.hbm [resolvable:$true] %s23
      %s25 = sshll.u32 [#allocation2], 4
      %s26 = int_to_ptr.vmem [resolvable:$true] %s25
      %28 = dma.hbm_to_vmem [thread:$0]  %s24, 128, %s26, [#allocation3]
    $region5: #{tpu_custom_call.1} parent=1 // pred_fallthru
      _
    // Predicated region
    $region6: #{tpu_custom_call.1} parent=1 // pred_check
      _
    $region7: #{tpu_custom_call.1} parent=1 // pred_check_branch
      %30 = sbr.rel (0) target = $region9
    $region8: #{tpu_custom_call.1} parent=1 // pred_region
      %32 = vsyncadd [#allocation6], 0
      %s33 = sshll.u32 %s1, 4
      %s34 = int_to_ptr.hbm [resolvable:$true] %s33
      %s35 = sshll.u32 [#allocation5], 4
      %s36 = int_to_ptr.vmem [resolvable:$true] %s35
      %41 = dma.hbm_to_vmem [thread:$0]  %s34, 2048, %s36, [#allocation6], 128, 128, 8
    $region9: #{tpu_custom_call.1} parent=1 // pred_fallthru
      _
    // Predicated region
    $region10: #{tpu_custom_call.1} parent=1 // pred_check
      _
    $region11: #{tpu_custom_call.1} parent=1 // pred_check_branch
      %43 = sbr.rel (0) target = $region13
    $region12: #{tpu_custom_call.1} parent=1 // pred_region
      _
    $region13: #{tpu_custom_call.1} parent=1 // pred_fallthru
      _
    // Predicated region
    $region14: #{tpu_custom_call.1} parent=1 // pred_check
      _
    $region15: #{tpu_custom_call.1} parent=1 // pred_check_branch
      %45 = sbr.rel (0) target = $region17
    $region16: #{tpu_custom_call.1} parent=1 // pred_region
      _
    $region17: #{tpu_custom_call.1} parent=1 // pred_fallthru
      _
    // Predicated region
    $region18: #{tpu_custom_call.1} parent=1 // pred_check
      _
    $region19: #{tpu_custom_call.1} parent=1 // pred_check_branch
      %47 = sbr.rel (0) target = $region21
    $region20: #{tpu_custom_call.1} parent=1 // pred_region
      %49 = vsyncadd [#allocation6], 0
      %s50 = sshll.u32 %s4, 4
      %s51 = int_to_ptr.hbm [resolvable:$true] %s50
      %s52 = sshll.u32 [#allocation7], 4
      %s53 = int_to_ptr.vmem [resolvable:$true] %s52
      %58 = dma.hbm_to_vmem [thread:$0]  %s51, 2048, %s53, [#allocation6], 128, 128, 8
    $region21: #{tpu_custom_call.1} parent=1 // pred_fallthru
      _
    // Predicated region
    $region22: #{tpu_custom_call.1} parent=1 // pred_check
      _
    $region23: #{tpu_custom_call.1} parent=1 // pred_check_branch
      %60 = sbr.rel (0) target = $region25
    $region24: #{tpu_custom_call.1} parent=1 // pred_region
      _
    $region25: #{tpu_custom_call.1} parent=1 // pred_fallthru
      _
    // Predicated region
    $region26: #{tpu_custom_call.1} parent=1 // pred_check
      _
    $region27: #{tpu_custom_call.1} parent=1 // pred_check_branch
      %62 = sbr.rel (0) target = $region29
    $region28: #{tpu_custom_call.1} parent=1 // pred_region
      _
    $region29: #{tpu_custom_call.1} parent=1 // pred_fallthru
      _
    // Predicated region
    $region30: #{tpu_custom_call.1} parent=1 // pred_check
      _
    $region31: #{tpu_custom_call.1} parent=1 // pred_check_branch
      %64 = sbr.rel (0) target = $region33
    $region32: #{tpu_custom_call.1} parent=1 // pred_region
      %66 = vsyncadd [#allocation9], 0
      %s67 = sshll.u32 %s7, 4
      %s68 = int_to_ptr.hbm [resolvable:$true] %s67
      %s69 = sshll.u32 [#allocation8], 4
      %s70 = int_to_ptr.vmem [resolvable:$true] %s69
      %75 = dma.hbm_to_vmem [thread:$0]  %s68, 2048, %s70, [#allocation9], 128, 128, 8
    $region33: #{tpu_custom_call.1} parent=1 // pred_fallthru
      _
    // Predicated region
    $region34: #{tpu_custom_call.1} parent=1 // pred_check
      _
    $region35: #{tpu_custom_call.1} parent=1 // pred_check_branch
      %77 = sbr.rel (0) target = $region37
    $region36: #{tpu_custom_call.1} parent=1 // pred_region
      _
    $region37: #{tpu_custom_call.1} parent=1 // pred_fallthru
      _
    // Predicated region
    $region38: #{tpu_custom_call.1} parent=1 // pred_check
      _
    $region39: #{tpu_custom_call.1} parent=1 // pred_check_branch
      %79 = sbr.rel (0) target = $region41
    $region40: #{tpu_custom_call.1} parent=1 // pred_region
      %81 = dma.done [#allocation3], 128
    $region41: #{tpu_custom_call.1} parent=1 // pred_fallthru
      _
    // Predicated region
    $region42: #{tpu_custom_call.1} parent=1 // pred_check
      _
    $region43: #{tpu_custom_call.1} parent=1 // pred_check_branch
      %83 = sbr.rel (0) target = $region45
    $region44: #{tpu_custom_call.1} parent=1 // pred_region
      %85 = dma.done [#allocation6], 2048
    $region45: #{tpu_custom_call.1} parent=1 // pred_fallthru
      _
    // Predicated region
    $region46: #{tpu_custom_call.1} parent=1 // pred_check
      _
    $region47: #{tpu_custom_call.1} parent=1 // pred_check_branch
      %87 = sbr.rel (0) target = $region49
    $region48: #{tpu_custom_call.1} parent=1 // pred_region
      %89 = dma.done [#allocation6], 2048
    $region49: #{tpu_custom_call.1} parent=1 // pred_fallthru
      _
    // Predicated region
    $region50: #{tpu_custom_call.1} parent=1 // pred_check
      _
    $region51: #{tpu_custom_call.1} parent=1 // pred_check_branch
      %91 = sbr.rel (0) target = $region53
    $region52: #{tpu_custom_call.1} parent=1 // pred_region
      %93 = dma.done [#allocation9], 2048
    $region53: #{tpu_custom_call.1} parent=1 // pred_fallthru
      _
    %v94 = vld [vmem:[#allocation2] sm:$0xff]
    %v95 = vld [vmem:[#allocation5] sm:$0xff]
    %v96 = vld [vmem:[#allocation5 + $0x8] sm:$0xff]
    %v97 = vld [vmem:[#allocation5 + $0x10] sm:$0xff]
    %v98 = vld [vmem:[#allocation5 + $0x18] sm:$0xff]
    %v99 = vld [vmem:[#allocation5 + $0x20] sm:$0xff]
    %v100 = vld [vmem:[#allocation5 + $0x28] sm:$0xff]
    %v101 = vld [vmem:[#allocation5 + $0x30] sm:$0xff]
    %v102 = vld [vmem:[#allocation5 + $0x38] sm:$0xff]
    %v103 = vld [vmem:[#allocation5 + $0x40] sm:$0xff]
    %v104 = vld [vmem:[#allocation5 + $0x48] sm:$0xff]
    %v105 = vld [vmem:[#allocation5 + $0x50] sm:$0xff]
    %v106 = vld [vmem:[#allocation5 + $0x58] sm:$0xff]
    %v107 = vld [vmem:[#allocation5 + $0x60] sm:$0xff]
    %v108 = vld [vmem:[#allocation5 + $0x68] sm:$0xff]
    %v109 = vld [vmem:[#allocation5 + $0x70] sm:$0xff]
    %v110 = vld [vmem:[#allocation5 + $0x78] sm:$0xff]
    %111 = vmatpush.msra.mxu0 %v110
    %112 = vmatpush.msra.mxu0 %v109
    %113 = vmatpush.msra.mxu0 %v108
    %114 = vmatpush.msra.mxu0 %v107
    %115 = vmatpush.msra.mxu0 %v106
    %116 = vmatpush.msra.mxu0 %v105
    %117 = vmatpush.msra.mxu0 %v104
    %118 = vmatpush.msra.mxu0 %v103
    %119 = vmatpush.msra.mxu0 %v102
    %120 = vmatpush.msra.mxu0 %v101
    %121 = vmatpush.msra.mxu0 %v100
    %122 = vmatpush.msra.mxu0 %v99
    %123 = vmatpush.msra.mxu0 %v98
    %124 = vmatpush.msra.mxu0 %v97
    %125 = vmatpush.msra.mxu0 %v96
    %126 = vmatpush.msra.mxu0 %v95
    %127 = vmatmul.f32.gmra.mxu0 %v94
    %v128 = vpop.f32.mrf.mxu0
    %v129 = vadd.f32 0.0, %v128
    %130 = vdwg.mxu0
    %v131 = vrot.slane %v129, 4
    %v132 = vadd.f32 %v129, %v131
    %v133 = vrot.slane %v132, 2
    %v134 = vadd.f32 %v132, %v133
    %v135 = vrot.slane %v134, 1
    %v136 = vadd.f32 %v134, %v135
    %v137 = vrcp.pop 8.0
    %v138 = vmul.f32 8.0, %v137
    %v139 = vsub.f32 1.0, %v138
    %v140 = vmul.f32 %v137, %v139
    %v141 = vadd.f32 %v137, %v140
    %vm142 = vweird.f32 %v137
    %v143 = vsel %vm142, %v137, %v141
    %v144 = vmul.f32 %v136, %v143
    %v145 = vsub.f32 %v129, %v144
    %v146 = vmul.f32 %v145, %v145
    %v147 = vrot.slane %v146, 4
    %v148 = vadd.f32 %v146, %v147
    %v149 = vrot.slane %v148, 2
    %v150 = vadd.f32 %v148, %v149
    %v151 = vrot.slane %v150, 1
    %v152 = vadd.f32 %v150, %v151
    %v153 = vmul.f32 %v152, %v143
    %v154 = vld [vmem:[%s2] sm:$0x1]
    %v155 = vadd.f32 %v153, 1e-05
    %v156 = vrsqrt.pop %v155
    %v157 = vmul.f32 %v156, %v155
    %v158 = vmul.f32 %v157, %v156
    %v159 = vmul.f32 0.5, %v158
    %v160 = vsub.f32 1.5, %v159
    %v161 = vmul.f32 %v156, %v160
    %vm162 = vweird.f32 %v155
    %vm163 = vweird.f32 %v156
    %vm164 = vmor %vm162, %vm163
    %v165 = vsel %vm164, %v156, %v161
    %v166 = vmul.f32 %v154, %v165
    %v167 = vld [vmem:[%s3] sm:$0x1]
    %v168 = vmul.f32 %v144, %v166
    %v169 = vsub.f32 %v167, %v168
    %v171 = vperm.slane %v166, 0
    %v173 = vmul.f32 %v129, %v171
    %v175 = vperm.slane %v169, 0
    %v177 = vadd.f32 %v173, %v175
    %v178 = vmax.f32 %v177, 0.0
    %v179 = vld [vmem:[#allocation7] sm:$0xff]
    %v180 = vld [vmem:[#allocation7 + $0x8] sm:$0xff]
    %v181 = vld [vmem:[#allocation7 + $0x10] sm:$0xff]
    %v182 = vld [vmem:[#allocation7 + $0x18] sm:$0xff]
    %v183 = vld [vmem:[#allocation7 + $0x20] sm:$0xff]
    %v184 = vld [vmem:[#allocation7 + $0x28] sm:$0xff]
    %v185 = vld [vmem:[#allocation7 + $0x30] sm:$0xff]
    %v186 = vld [vmem:[#allocation7 + $0x38] sm:$0xff]
    %v187 = vld [vmem:[#allocation7 + $0x40] sm:$0xff]
    %v188 = vld [vmem:[#allocation7 + $0x48] sm:$0xff]
    %v189 = vld [vmem:[#allocation7 + $0x50] sm:$0xff]
    %v190 = vld [vmem:[#allocation7 + $0x58] sm:$0xff]
    %v191 = vld [vmem:[#allocation7 + $0x60] sm:$0xff]
    %v192 = vld [vmem:[#allocation7 + $0x68] sm:$0xff]
    %v193 = vld [vmem:[#allocation7 + $0x70] sm:$0xff]
    %v194 = vld [vmem:[#allocation7 + $0x78] sm:$0xff]
    %195 = vmatpush.msra.mxu0 %v194
    %196 = vmatpush.msra.mxu0 %v193
    %197 = vmatpush.msra.mxu0 %v192
    %198 = vmatpush.msra.mxu0 %v191
    %199 = vmatpush.msra.mxu0 %v190
    %200 = vmatpush.msra.mxu0 %v189
    %201 = vmatpush.msra.mxu0 %v188
    %202 = vmatpush.msra.mxu0 %v187
    %203 = vmatpush.msra.mxu0 %v186
    %204 = vmatpush.msra.mxu0 %v185
    %205 = vmatpush.msra.mxu0 %v184
    %206 = vmatpush.msra.mxu0 %v183
    %207 = vmatpush.msra.mxu0 %v182
    %208 = vmatpush.msra.mxu0 %v181
    %209 = vmatpush.msra.mxu0 %v180
    %210 = vmatpush.msra.mxu0 %v179
    %211 = vmatmul.f32.gmra.mxu0 %v178
    %v212 = vpop.f32.mrf.mxu0
    %v213 = vadd.f32 0.0, %v212
    %214 = vdwg.mxu0
    %v215 = vrot.slane %v213, 4
    %v216 = vadd.f32 %v213, %v215
    %v217 = vrot.slane %v216, 2
    %v218 = vadd.f32 %v216, %v217
    %v219 = vrot.slane %v218, 1
    %v220 = vadd.f32 %v218, %v219
    %v221 = vmul.f32 %v220, %v143
    %v222 = vsub.f32 %v213, %v221
    %v223 = vmul.f32 %v222, %v222
    %v224 = vrot.slane %v223, 4
    %v225 = vadd.f32 %v223, %v224
    %v226 = vrot.slane %v225, 2
    %v227 = vadd.f32 %v225, %v226
    %v228 = vrot.slane %v227, 1
    %v229 = vadd.f32 %v227, %v228
    %v230 = vmul.f32 %v229, %v143
    %v231 = vld [vmem:[%s5] sm:$0x1]
    %v232 = vadd.f32 %v230, 1e-05
    %v233 = vrsqrt.pop %v232
    %v234 = vmul.f32 %v233, %v232
    %v235 = vmul.f32 %v234, %v233
    %v236 = vmul.f32 0.5, %v235
    %v237 = vsub.f32 1.5, %v236
    %v238 = vmul.f32 %v233, %v237
    %vm239 = vweird.f32 %v232
    %vm240 = vweird.f32 %v233
    %vm241 = vmor %vm239, %vm240
    %v242 = vsel %vm241, %v233, %v238
    %v243 = vmul.f32 %v231, %v242
    %v244 = vld [vmem:[%s6] sm:$0x1]
    %v245 = vmul.f32 %v221, %v243
    %v246 = vsub.f32 %v244, %v245
    %v248 = vperm.slane %v243, 0
    %v250 = vmul.f32 %v213, %v248
    %v252 = vperm.slane %v246, 0
    %v254 = vadd.f32 %v250, %v252
    %v255 = vmax.f32 %v254, 0.0
    %v256 = vld [vmem:[#allocation8] sm:$0xff]
    %v257 = vld [vmem:[#allocation8 + $0x8] sm:$0xff]
    %v258 = vld [vmem:[#allocation8 + $0x10] sm:$0xff]
    %v259 = vld [vmem:[#allocation8 + $0x18] sm:$0xff]
    %v260 = vld [vmem:[#allocation8 + $0x20] sm:$0xff]
    %v261 = vld [vmem:[#allocation8 + $0x28] sm:$0xff]
    %v262 = vld [vmem:[#allocation8 + $0x30] sm:$0xff]
    %v263 = vld [vmem:[#allocation8 + $0x38] sm:$0xff]
    %v264 = vld [vmem:[#allocation8 + $0x40] sm:$0xff]
    %v265 = vld [vmem:[#allocation8 + $0x48] sm:$0xff]
    %v266 = vld [vmem:[#allocation8 + $0x50] sm:$0xff]
    %v267 = vld [vmem:[#allocation8 + $0x58] sm:$0xff]
    %v268 = vld [vmem:[#allocation8 + $0x60] sm:$0xff]
    %v269 = vld [vmem:[#allocation8 + $0x68] sm:$0xff]
    %v270 = vld [vmem:[#allocation8 + $0x70] sm:$0xff]
    %v271 = vld [vmem:[#allocation8 + $0x78] sm:$0xff]
    %v272 = vld [vmem:[%s8] sm:$0x1]
    %v274 = vperm.slane %v272, 0
    %276 = vmatpush.msra.mxu0 %v271
    %277 = vmatpush.msra.mxu0 %v270
    %278 = vmatpush.msra.mxu0 %v269
    %279 = vmatpush.msra.mxu0 %v268
    %280 = vmatpush.msra.mxu0 %v267
    %281 = vmatpush.msra.mxu0 %v266
    %282 = vmatpush.msra.mxu0 %v265
    %283 = vmatpush.msra.mxu0 %v264
    %284 = vmatpush.msra.mxu0 %v263
    %285 = vmatpush.msra.mxu0 %v262
    %286 = vmatpush.msra.mxu0 %v261
    %287 = vmatpush.msra.mxu0 %v260
    %288 = vmatpush.msra.mxu0 %v259
    %289 = vmatpush.msra.mxu0 %v258
    %290 = vmatpush.msra.mxu0 %v257
    %291 = vmatpush.msra.mxu0 %v256
    %292 = vmatmul.f32.gmra.mxu0 %v255
    %v293 = vpop.f32.mrf.mxu0
    %v294 = vadd.f32 %v274, %v293
    %295 = vdwg.mxu0
    %v296 = vsub.f32 0.0, %v294
    %v297 = vmul.f32 %v296, 1.442695
    %v298 = vpow.pop %v297
    %v299 = vadd.f32 %v298, 1.0
    %v300 = vrcp.pop %v299
    %v301 = vmul.f32 %v299, %v300
    %v302 = vsub.f32 1.0, %v301
    %v303 = vmul.f32 %v300, %v302
    %v304 = vadd.f32 %v300, %v303
    %vm305 = vweird.f32 %v299
    %vm306 = vweird.f32 %v300
    %vm307 = vmor %vm305, %vm306
    %v308 = vsel %vm307, %v300, %v304
    %v309 = vand.u32 2147483647, %v299
    %vm310 = vcmp.eq.f32.partialorder %v309, 8.507059e+37
    %v311 = vand.u32 %v299, 2147483648
    %v312 = vor.u32 1.1754944e-38, %v311
    %v313 = vsel %vm310, %v312, %v308
    %314 = vst [vmem:[#allocation10] sm:$0xff] %v313
    // Predicated region
    $region54: #{tpu_custom_call.1} parent=1 // pred_check
      _
    $region55: #{tpu_custom_call.1} parent=1 // pred_check_branch
      %316 = sbr.rel (0) target = $region57
    $region56: #{tpu_custom_call.1} parent=1 // pred_region
      %318 = vsyncadd [#allocation4], 0
      %s320 = sshll.u32 [#allocation10], 4
      %s321 = int_to_ptr.vmem [resolvable:$true] %s320
      %s322 = sshll.u32 %s9, 4
      %s323 = int_to_ptr.hbm [resolvable:$true] %s322
      %325 = dma.vmem_to_hbm [thread:$0]  %s321, 128, %s323, [#allocation4]
    $region57: #{tpu_custom_call.1} parent=1 // pred_fallthru
      _
    // Predicated region
    $region58: #{tpu_custom_call.1} parent=1 // pred_check
      _
    $region59: #{tpu_custom_call.1} parent=1 // pred_check_branch
      %327 = sbr.rel (0) target = $region61
    $region60: #{tpu_custom_call.1} parent=1 // pred_region
      %329 = dma.done [#allocation4], 128
    $region61: #{tpu_custom_call.1} parent=1 // pred_fallthru
      _
    %330 = vsyncpa [#allocation3], 1
    %331 = vsyncpa [#allocation6], 1
    %332 = vsyncpa [#allocation9], 1
    %333 = vsyncpa [#allocation4], 1

</llo_original>
